<compile_context>
chip_gen: v5e
topology: v5e:2x2
jax: 0.10.0
libtpu: 0.0.40
codegen_flags: <defaults>
</compile_context>

<pallas_src>
import functools

import jax
import jax.numpy as jnp
from jax.experimental import pallas as pl
from jax.experimental.pallas import tpu as pltpu


def _nn_forward_kernel(a_ref, w1_ref, w2_ref, out_ref, *, normalize):
    """Batch-on-lanes forward pass.

    a_ref  : VMEM [in_dim, batch]   (batch on the lane axis)
    w1_ref : SMEM [in_dim, hidden]  (read element-wise as scalar operands)
    w2_ref : SMEM [hidden, out_dim]
    out_ref: VMEM [out_dim, batch]  (lane-dense row store)
    """
    in_dim = a_ref.shape[0]
    hidden = w1_ref.shape[1]
    out_dim = w2_ref.shape[1]

    a_t = a_ref[...]                                   # [in_dim, batch]
    if normalize:
        # Fold the script-level `A = torch.div(A, A_max)` into the same launch.
        a_t = a_t / jnp.max(a_t)

    # ---- Layer 1 + sigmoid: z2[j, :] = sigmoid(sum_k w1[k, j] * a_t[k, :]) ----
    # Each term: (SMEM scalar) x (lane-contiguous sublane row) -> VPU FMA only.
    z2_rows = []
    for j in range(hidden):
        acc = w1_ref[0, j] * a_t[0:1, :]               # [1, batch]
        for k in range(1, in_dim):
            acc = acc + w1_ref[k, j] * a_t[k:k + 1, :]
        z2_rows.append(jax.nn.sigmoid(acc))            # exp/recip on EUP slot

    # ---- Layer 2 + sigmoid: out[o, :] = sigmoid(sum_j w2[j, o] * z2[j, :]) ----
    for o in range(out_dim):
        acc = w2_ref[0, o] * z2_rows[0]
        for j in range(1, hidden):
            acc = acc + w2_ref[j, o] * z2_rows[j]
        out_ref[o:o + 1, :] = jax.nn.sigmoid(acc).astype(out_ref.dtype)


def nn_forward(a, w1, w2, *, normalize=False):
    """sigmoid(sigmoid(a @ w1) @ w2). If normalize, a is first divided by max(a)."""
    batch, in_dim = a.shape
    hidden = w1.shape[1]
    out_dim = w2.shape[1]
    assert w1.shape == (in_dim, hidden)
    assert w2.shape == (hidden, out_dim)

    # Layout plumbing only (not compute hoisting): put batch on the lane axis
    # so all in-kernel work is lane-dense VPU ops and the output store is a
    # full lane-contiguous row.
    a_t = a.T.astype(jnp.float32)                      # [in_dim, batch]

    out_t = pl.pallas_call(
        functools.partial(_nn_forward_kernel, normalize=normalize),
        out_shape=jax.ShapeDtypeStruct((out_dim, batch), jnp.float32),
        in_specs=[
            pl.BlockSpec(memory_space=pltpu.MemorySpace.VMEM),   # activations
            pl.BlockSpec(memory_space=pltpu.MemorySpace.SMEM),   # W1 (2x3 scalars)
            pl.BlockSpec(memory_space=pltpu.MemorySpace.SMEM),   # W2 (3x1 scalars)
        ],
        out_specs=pl.BlockSpec(memory_space=pltpu.MemorySpace.VMEM),
    )(a_t, w1.astype(jnp.float32), w2.astype(jnp.float32))

    return out_t.T                                     # [batch, out_dim]


def reference_forward(a, w1, w2):
    z2 = jax.nn.sigmoid(a @ w1)
    return jax.nn.sigmoid(z2 @ w2)


if __name__ == "__main__":
    key = jax.random.PRNGKey(0)
    k_a, k_w1, k_w2 = jax.random.split(key, 3)

    input_size, hidden_size, output_size = 2, 3, 1
    batch = 8

    # Parameters as in NeuralNetwork.__init__ (torch.randn -> standard normal).
    w1 = jax.random.normal(k_w1, (input_size, hidden_size), dtype=jnp.float32)
    w2 = jax.random.normal(k_w2, (hidden_size, output_size), dtype=jnp.float32)

    # Input A, scaled like `A = torch.div(A, A_max)` in the original script.
    a_raw = jax.random.uniform(k_a, (batch, input_size), dtype=jnp.float32,
                               minval=0.0, maxval=100.0)
    a = a_raw / jnp.max(a_raw)

    # Pure forward-pass semantics (module.forward on pre-normalized A).
    out = jax.block_until_ready(nn_forward(a, w1, w2))
    ref = reference_forward(a, w1, w2)
    assert out.shape == (batch, output_size)
    assert jnp.allclose(out, ref, atol=1e-5, rtol=1e-5), (out, ref)

    # Fused path: normalization folded into the same (single) pallas_call.
    out_fused = jax.block_until_ready(nn_forward(a_raw, w1, w2, normalize=True))
    assert jnp.allclose(out_fused, ref, atol=1e-5, rtol=1e-5), (out_fused, ref)

    print("KERNEL_OK")
</pallas_src>

<mosaic_0001>
module attributes {stable_mosaic.version = 11 : i64} {
  func.func @_nn_forward_kernel(%arg0: memref<2x8xf32, #tpu.memory_space<vmem>>, %arg1: memref<2x3xf32, #tpu.memory_space<smem>>, %arg2: memref<3x1xf32, #tpu.memory_space<smem>>, %arg3: memref<1x8xf32, #tpu.memory_space<vmem>>) attributes {dimension_semantics = [], scalar_prefetch = 0 : i64, scratch_operands = 0 : i64, tpu.core_type = #tpu.core_type<tc>} {
    %c0 = arith.constant 0 : index
    %c0_0 = arith.constant 0 : index
    %0 = vector.load %arg0[%c0, %c0_0] : memref<2x8xf32, #tpu.memory_space<vmem>>, vector<2x8xf32>
    %c0_1 = arith.constant 0 : index
    %c0_2 = arith.constant 0 : index
    %1 = memref.load %arg1[%c0_1, %c0_2] : memref<2x3xf32, #tpu.memory_space<smem>>
    %2 = vector.extract_strided_slice %0 {offsets = [0, 0], sizes = [1, 8], strides = [1, 1]} : vector<2x8xf32> to vector<1x8xf32>
    %3 = vector.broadcast %1 : f32 to vector<1x8xf32>
    %4 = arith.mulf %3, %2 : vector<1x8xf32>
    %c1 = arith.constant 1 : index
    %c0_3 = arith.constant 0 : index
    %5 = memref.load %arg1[%c1, %c0_3] : memref<2x3xf32, #tpu.memory_space<smem>>
    %6 = vector.extract_strided_slice %0 {offsets = [1, 0], sizes = [1, 8], strides = [1, 1]} : vector<2x8xf32> to vector<1x8xf32>
    %7 = vector.broadcast %5 : f32 to vector<1x8xf32>
    %8 = arith.mulf %7, %6 : vector<1x8xf32>
    %9 = arith.addf %4, %8 : vector<1x8xf32>
    %10 = arith.negf %9 : vector<1x8xf32>
    %11 = math.exp %10 : vector<1x8xf32>
    %cst = arith.constant 1.000000e+00 : f32
    %12 = vector.broadcast %cst : f32 to vector<1x8xf32>
    %13 = arith.addf %12, %11 : vector<1x8xf32>
    %14 = arith.divf %12, %13 : vector<1x8xf32>
    %c0_4 = arith.constant 0 : index
    %c1_5 = arith.constant 1 : index
    %15 = memref.load %arg1[%c0_4, %c1_5] : memref<2x3xf32, #tpu.memory_space<smem>>
    %16 = vector.extract_strided_slice %0 {offsets = [0, 0], sizes = [1, 8], strides = [1, 1]} : vector<2x8xf32> to vector<1x8xf32>
    %17 = vector.broadcast %15 : f32 to vector<1x8xf32>
    %18 = arith.mulf %17, %16 : vector<1x8xf32>
    %c1_6 = arith.constant 1 : index
    %c1_7 = arith.constant 1 : index
    %19 = memref.load %arg1[%c1_6, %c1_7] : memref<2x3xf32, #tpu.memory_space<smem>>
    %20 = vector.extract_strided_slice %0 {offsets = [1, 0], sizes = [1, 8], strides = [1, 1]} : vector<2x8xf32> to vector<1x8xf32>
    %21 = vector.broadcast %19 : f32 to vector<1x8xf32>
    %22 = arith.mulf %21, %20 : vector<1x8xf32>
    %23 = arith.addf %18, %22 : vector<1x8xf32>
    %24 = arith.negf %23 : vector<1x8xf32>
    %25 = math.exp %24 : vector<1x8xf32>
    %cst_8 = arith.constant 1.000000e+00 : f32
    %26 = vector.broadcast %cst_8 : f32 to vector<1x8xf32>
    %27 = arith.addf %26, %25 : vector<1x8xf32>
    %28 = arith.divf %26, %27 : vector<1x8xf32>
    %c0_9 = arith.constant 0 : index
    %c2 = arith.constant 2 : index
    %29 = memref.load %arg1[%c0_9, %c2] : memref<2x3xf32, #tpu.memory_space<smem>>
    %30 = vector.extract_strided_slice %0 {offsets = [0, 0], sizes = [1, 8], strides = [1, 1]} : vector<2x8xf32> to vector<1x8xf32>
    %31 = vector.broadcast %29 : f32 to vector<1x8xf32>
    %32 = arith.mulf %31, %30 : vector<1x8xf32>
    %c1_10 = arith.constant 1 : index
    %c2_11 = arith.constant 2 : index
    %33 = memref.load %arg1[%c1_10, %c2_11] : memref<2x3xf32, #tpu.memory_space<smem>>
    %34 = vector.extract_strided_slice %0 {offsets = [1, 0], sizes = [1, 8], strides = [1, 1]} : vector<2x8xf32> to vector<1x8xf32>
    %35 = vector.broadcast %33 : f32 to vector<1x8xf32>
    %36 = arith.mulf %35, %34 : vector<1x8xf32>
    %37 = arith.addf %32, %36 : vector<1x8xf32>
    %38 = arith.negf %37 : vector<1x8xf32>
    %39 = math.exp %38 : vector<1x8xf32>
    %cst_12 = arith.constant 1.000000e+00 : f32
    %40 = vector.broadcast %cst_12 : f32 to vector<1x8xf32>
    %41 = arith.addf %40, %39 : vector<1x8xf32>
    %42 = arith.divf %40, %41 : vector<1x8xf32>
    %c0_13 = arith.constant 0 : index
    %c0_14 = arith.constant 0 : index
    %43 = memref.load %arg2[%c0_13, %c0_14] : memref<3x1xf32, #tpu.memory_space<smem>>
    %44 = vector.broadcast %43 : f32 to vector<1x8xf32>
    %45 = arith.mulf %44, %14 : vector<1x8xf32>
    %c1_15 = arith.constant 1 : index
    %c0_16 = arith.constant 0 : index
    %46 = memref.load %arg2[%c1_15, %c0_16] : memref<3x1xf32, #tpu.memory_space<smem>>
    %47 = vector.broadcast %46 : f32 to vector<1x8xf32>
    %48 = arith.mulf %47, %28 : vector<1x8xf32>
    %49 = arith.addf %45, %48 : vector<1x8xf32>
    %c2_17 = arith.constant 2 : index
    %c0_18 = arith.constant 0 : index
    %50 = memref.load %arg2[%c2_17, %c0_18] : memref<3x1xf32, #tpu.memory_space<smem>>
    %51 = vector.broadcast %50 : f32 to vector<1x8xf32>
    %52 = arith.mulf %51, %42 : vector<1x8xf32>
    %53 = arith.addf %49, %52 : vector<1x8xf32>
    %54 = arith.negf %53 : vector<1x8xf32>
    %55 = math.exp %54 : vector<1x8xf32>
    %cst_19 = arith.constant 1.000000e+00 : f32
    %56 = vector.broadcast %cst_19 : f32 to vector<1x8xf32>
    %57 = arith.addf %56, %55 : vector<1x8xf32>
    %58 = arith.divf %56, %57 : vector<1x8xf32>
    %c0_20 = arith.constant 0 : index
    %c0_21 = arith.constant 0 : index
    %59 = vector.load %arg3[%c0_20, %c0_21] : memref<1x8xf32, #tpu.memory_space<vmem>>, vector<1x8xf32>
    tpu.vector_store %arg3[%c0_20, %c0_21], %58 {strides = array<i32>} : memref<1x8xf32, #tpu.memory_space<vmem>>, vector<1x8xf32>,
    return
  }
}

</mosaic_0001>

<llo_original>
// kernel: tpu_custom_call.1
$region0: #{tpu_custom_call.1}
  #allocation0 [shape = 'u32[]', space=smem, size = 0x4, offset = 0x4, fixed_abs, tag = 'smem constant byte address 0x4 - core index']
  #allocation1 [shape = 'u32[72,128]{1,0:T(1,128)}', space=vmem, size = 0x9000, scoped, tag = 'internal scratch']
  %s0 = inlined_call_operand.vmem [shape: f32[2,8], index: 0, kind: input, shape index: {}]
  %s1 = inlined_call_operand.vmem [shape: f32[2,3], index: 1, kind: input, shape index: {}]
  %s2 = inlined_call_operand.vmem [shape: f32[3,1], index: 2, kind: input, shape index: {}]
  %s3 = inlined_call_operand.hbm [shape: f32[1,8], index: 3, kind: output, shape index: {}]
  %s4 = sld [smem:[#allocation0]]
  $region30: #{tpu_custom_call.1} parent=0
    _
  %s6 = ssub.s32 1, %s4
  %s7 = scalar_select 0, %s6, %s4
  $region1: #{tpu_custom_call.1} parent=0
    #allocation2 [shape = 'u8[1024]{0}', space=smem, size = 0x400, scoped, tag = 'input window, operand 1, single buffered']
    #allocation3 [shape = 's32[1]{0}', space=sflag, size = 0x4, scoped, tag = 'scoped memory for tpu_custom_call.1']
    #allocation4 [shape = 's32[1]{0}', space=sflag, size = 0x4, scoped, tag = 'scoped memory for tpu_custom_call.1']
    #allocation5 [shape = 'u8[2048]{0}', space=smem, size = 0x800, scoped, tag = 'input window, operand 2, single buffered']
    #allocation6 [shape = 's32[1]{0}', space=sflag, size = 0x4, scoped, tag = 'scoped memory for tpu_custom_call.1']
    #allocation7 [shape = 'u8[512]{0}', space=vmem, size = 0x400, scoped, tag = 'output window, operand 0, single buffered']
    %8 = vsyncpa [#allocation4], 0
    %9 = vsyncpa [#allocation6], 0
    %10 = vsyncpa [#allocation3], 0
    // Predicated region
    $region2: #{tpu_custom_call.1} parent=1 // pred_check
      _
    $region3: #{tpu_custom_call.1} parent=1 // pred_check_branch
      %12 = sbr.rel (0) target = $region5
    $region4: #{tpu_custom_call.1} parent=1 // pred_region
      _
    $region5: #{tpu_custom_call.1} parent=1 // pred_fallthru
      _
    // Predicated region
    $region6: #{tpu_custom_call.1} parent=1 // pred_check
      _
    $region7: #{tpu_custom_call.1} parent=1 // pred_check_branch
      %14 = sbr.rel (0) target = $region9
    $region8: #{tpu_custom_call.1} parent=1 // pred_region
      %16 = vsyncadd [#allocation4], 0
      %s18 = sshll.u32 %s1, 4
      %s19 = int_to_ptr.vmem [resolvable:$true] %s18
      %21 = dma.vmem_to_smem %s19, 32, [#allocation2], [#allocation4]
    $region9: #{tpu_custom_call.1} parent=1 // pred_fallthru
      _
    // Predicated region
    $region10: #{tpu_custom_call.1} parent=1 // pred_check
      _
    $region11: #{tpu_custom_call.1} parent=1 // pred_check_branch
      %23 = sbr.rel (0) target = $region13
    $region12: #{tpu_custom_call.1} parent=1 // pred_region
      %25 = vsyncadd [#allocation6], 0
      %s27 = sshll.u32 %s2, 4
      %s28 = int_to_ptr.vmem [resolvable:$true] %s27
      %30 = dma.vmem_to_smem %s28, 64, [#allocation5], [#allocation6]
    $region13: #{tpu_custom_call.1} parent=1 // pred_fallthru
      _
    // Predicated region
    $region14: #{tpu_custom_call.1} parent=1 // pred_check
      _
    $region15: #{tpu_custom_call.1} parent=1 // pred_check_branch
      %32 = sbr.rel (0) target = $region17
    $region16: #{tpu_custom_call.1} parent=1 // pred_region
      %34 = dma.done [#allocation4], 32
    $region17: #{tpu_custom_call.1} parent=1 // pred_fallthru
      _
    // Predicated region
    $region18: #{tpu_custom_call.1} parent=1 // pred_check
      _
    $region19: #{tpu_custom_call.1} parent=1 // pred_check_branch
      %36 = sbr.rel (0) target = $region21
    $region20: #{tpu_custom_call.1} parent=1 // pred_region
      %38 = dma.done [#allocation6], 64
    $region21: #{tpu_custom_call.1} parent=1 // pred_fallthru
      _
    %39 = sfence
    %v40 = vld [vmem:[%s0] sm:$0x3]
    %s41 = sld [smem:[#allocation2]]
    %v42 = vstv %s41
    %v43 = vmul.f32 %v42, %v40
    %s44 = sld [smem:[#allocation2 + $0x80]]
    %v45 = vstv %s44
    %v46 = vmul.f32 %v45, %v40
    %v48 = vrot.slane %v46, 1
    %v50 = vadd.f32 %v43, %v48
    %v51 = vxor.u32 %v50, 2147483648
    %v52 = vmul.f32 %v51, 1.442695
    %v53 = vpow.pop %v52
    %v54 = vadd.f32 %v53, 1.0
    %v55 = vrcp.pop %v54
    %v56 = vmul.f32 %v54, %v55
    %v57 = vsub.f32 1.0, %v56
    %v58 = vmul.f32 %v55, %v57
    %v59 = vadd.f32 %v55, %v58
    %vm60 = vweird.f32 %v54
    %vm61 = vweird.f32 %v55
    %vm62 = vmor %vm60, %vm61
    %v63 = vsel %vm62, %v55, %v59
    %v64 = vand.u32 2147483647, %v54
    %vm65 = vcmp.eq.f32.partialorder %v64, 8.507059e+37
    %v66 = vand.u32 %v54, 2147483648
    %v67 = vor.u32 1.1754944e-38, %v66
    %v68 = vsel %vm65, %v67, %v63
    %v69 = vmul.f32 1.0, %v68
    %s70 = sld [smem:[#allocation2 + $0x1]]
    %v71 = vstv %s70
    %v72 = vmul.f32 %v71, %v40
    %s73 = sld [smem:[#allocation2 + $0x81]]
    %v74 = vstv %s73
    %v75 = vmul.f32 %v74, %v40
    %v77 = vrot.slane %v75, 1
    %v79 = vadd.f32 %v72, %v77
    %v80 = vxor.u32 %v79, 2147483648
    %v81 = vmul.f32 %v80, 1.442695
    %v82 = vpow.pop %v81
    %v83 = vadd.f32 %v82, 1.0
    %v84 = vrcp.pop %v83
    %v85 = vmul.f32 %v83, %v84
    %v86 = vsub.f32 1.0, %v85
    %v87 = vmul.f32 %v84, %v86
    %v88 = vadd.f32 %v84, %v87
    %vm89 = vweird.f32 %v83
    %vm90 = vweird.f32 %v84
    %vm91 = vmor %vm89, %vm90
    %v92 = vsel %vm91, %v84, %v88
    %v93 = vand.u32 2147483647, %v83
    %vm94 = vcmp.eq.f32.partialorder %v93, 8.507059e+37
    %v95 = vand.u32 %v83, 2147483648
    %v96 = vor.u32 1.1754944e-38, %v95
    %v97 = vsel %vm94, %v96, %v92
    %v98 = vmul.f32 1.0, %v97
    %s99 = sld [smem:[#allocation2 + $0x2]]
    %v100 = vstv %s99
    %v101 = vmul.f32 %v100, %v40
    %s102 = sld [smem:[#allocation2 + $0x82]]
    %v103 = vstv %s102
    %v104 = vmul.f32 %v103, %v40
    %v106 = vrot.slane %v104, 1
    %v108 = vadd.f32 %v101, %v106
    %v109 = vxor.u32 %v108, 2147483648
    %v110 = vmul.f32 %v109, 1.442695
    %v111 = vpow.pop %v110
    %v112 = vadd.f32 %v111, 1.0
    %v113 = vrcp.pop %v112
    %v114 = vmul.f32 %v112, %v113
    %v115 = vsub.f32 1.0, %v114
    %v116 = vmul.f32 %v113, %v115
    %v117 = vadd.f32 %v113, %v116
    %vm118 = vweird.f32 %v112
    %vm119 = vweird.f32 %v113
    %vm120 = vmor %vm118, %vm119
    %v121 = vsel %vm120, %v113, %v117
    %v122 = vand.u32 2147483647, %v112
    %vm123 = vcmp.eq.f32.partialorder %v122, 8.507059e+37
    %v124 = vand.u32 %v112, 2147483648
    %v125 = vor.u32 1.1754944e-38, %v124
    %v126 = vsel %vm123, %v125, %v121
    %v127 = vmul.f32 1.0, %v126
    %s128 = sld [smem:[#allocation5]]
    %v129 = vstv %s128
    %v130 = vmul.f32 %v129, %v69
    %s131 = sld [smem:[#allocation5 + $0x80]]
    %v132 = vstv %s131
    %v133 = vmul.f32 %v132, %v98
    %v134 = vadd.f32 %v130, %v133
    %s135 = sld [smem:[#allocation5 + $0x100]]
    %v136 = vstv %s135
    %v137 = vmul.f32 %v136, %v127
    %v138 = vadd.f32 %v134, %v137
    %v139 = vxor.u32 %v138, 2147483648
    %v140 = vmul.f32 %v139, 1.442695
    %v141 = vpow.pop %v140
    %v142 = vadd.f32 %v141, 1.0
    %v143 = vrcp.pop %v142
    %v144 = vmul.f32 %v142, %v143
    %v145 = vsub.f32 1.0, %v144
    %v146 = vmul.f32 %v143, %v145
    %v147 = vadd.f32 %v143, %v146
    %vm148 = vweird.f32 %v142
    %vm149 = vweird.f32 %v143
    %vm150 = vmor %vm148, %vm149
    %v151 = vsel %vm150, %v143, %v147
    %v152 = vand.u32 2147483647, %v142
    %vm153 = vcmp.eq.f32.partialorder %v152, 8.507059e+37
    %v154 = vand.u32 %v142, 2147483648
    %v155 = vor.u32 1.1754944e-38, %v154
    %v156 = vsel %vm153, %v155, %v151
    %v157 = vmul.f32 1.0, %v156
    %vm158 = vcmask 57344
    %159 = vst.msk [vmem:[#allocation7] sm:$0x1] %vm158, %v157
    // Predicated region
    $region22: #{tpu_custom_call.1} parent=1 // pred_check
      _
    $region23: #{tpu_custom_call.1} parent=1 // pred_check_branch
      %161 = sbr.rel (0) target = $region25
    $region24: #{tpu_custom_call.1} parent=1 // pred_region
      %163 = vsyncadd [#allocation3], 0
      %s165 = sshll.u32 [#allocation7], 4
      %s166 = int_to_ptr.vmem [resolvable:$true] %s165
      %s167 = sshll.u32 %s3, 4
      %s168 = int_to_ptr.hbm [resolvable:$true] %s167
      %170 = dma.vmem_to_hbm [thread:$0]  %s166, 16, %s168, [#allocation3]
    $region25: #{tpu_custom_call.1} parent=1 // pred_fallthru
      _
    // Predicated region
    $region26: #{tpu_custom_call.1} parent=1 // pred_check
      _
    $region27: #{tpu_custom_call.1} parent=1 // pred_check_branch
      %172 = sbr.rel (0) target = $region29
    $region28: #{tpu_custom_call.1} parent=1 // pred_region
      %174 = dma.done [#allocation3], 16
    $region29: #{tpu_custom_call.1} parent=1 // pred_fallthru
      _
    %175 = vsyncpa [#allocation3], 1
    %176 = vsyncpa [#allocation4], 1
    %177 = vsyncpa [#allocation6], 1

</llo_original>
